<compile_context>
chip_gen: v7x
topology: tpu7x:2x2x1
jax: 0.10.0
libtpu: 0.0.40
codegen_flags: <defaults>
</compile_context>

<pallas_src>
import math
import functools

import jax
import jax.numpy as jnp
from jax import lax
from jax.experimental import pallas as pl
from jax.experimental.pallas import tpu as pltpu


def _round_up(n, mult):
    return ((n + mult - 1) // mult) * mult


def _arcface_kernel(x_ref, w_ref, label_ref, o_ref, *,
                    s, cos_m, sin_m, th, mm, easy_margin):
    # x: (TB, D) pre-normalized, w: (TC, D) pre-normalized, label: (TB, 1) i32,
    # o: (TB, TC).  Grid = (class_tiles, batch_tiles); batch is the inner axis,
    # so the weight tile (indexed only by program_id(0)) stays resident in VMEM
    # while the small x / label tiles stream.
    cosine = lax.dot_general(
        x_ref[...], w_ref[...],
        dimension_numbers=(((1,), (1,)), ((), ())),   # contract over D, no w.T copy
        preferred_element_type=jnp.float32)

    tb, tc = o_ref.shape
    class_ids = pl.program_id(0) * tc + lax.broadcasted_iota(jnp.int32, (tb, tc), 1)
    is_target = class_ids == label_ref[...]           # (TB, TC), <=1 true per row

    # Margin math only on the per-row target cosine (TB, 1), not the full tile.
    cos_t = jnp.sum(jnp.where(is_target, cosine, 0.0), axis=-1, keepdims=True)
    sin_t = jnp.sqrt(jnp.maximum(1.0 - cos_t * cos_t, 0.0))   # clamp keeps sqrt finite
    phi_t = cos_t * cos_m - sin_t * sin_m
    if easy_margin:
        phi_t = jnp.where(cos_t > 0.0, phi_t, cos_t)
    else:
        phi_t = jnp.where(cos_t > th, phi_t, cos_t - mm)
    delta = (phi_t - cos_t) * s                       # (TB, 1)

    o_ref[...] = (cosine * s + jnp.where(is_target, delta, 0.0)).astype(o_ref.dtype)


def arcface_forward(x, weight, label, *, s=64.0, m=0.5, easy_margin=False,
                    block_b=None, block_c=None, compute_dtype=jnp.bfloat16,
                    out_dtype=jnp.float32):
    """x: (B, D), weight: (C, D), label: (B,) int -> (B, C) logits."""
    B, D = x.shape
    C, D2 = weight.shape
    assert D == D2, "feature dims must match"

    # --- hoisted, one-shot normalization (f32) + cast to MXU compute dtype ---
    x32 = x.astype(jnp.float32)
    w32 = weight.astype(jnp.float32)
    xn = x32 * lax.rsqrt(jnp.maximum(jnp.sum(x32 * x32, axis=-1, keepdims=True), 1e-24))
    wn = w32 * lax.rsqrt(jnp.maximum(jnp.sum(w32 * w32, axis=-1, keepdims=True), 1e-24))
    xn = xn.astype(compute_dtype)
    wn = wn.astype(compute_dtype)

    # --- tile sizes: TB multiple of 8 (sublanes, >=256 fills the MXU M dim),
    #     TC multiple of 128 (lanes); shrink TC for large D to keep VMEM low. ---
    if block_b is None:
        block_b = 256
    if block_c is None:
        block_c = 1024 if D >= 1024 else 2048
    block_b = max(8, min(_round_up(B, 8), _round_up(block_b, 8)))
    block_c = max(128, min(_round_up(C, 128), _round_up(block_c, 128)))

    Bp = _round_up(B, block_b)
    Cp = _round_up(C, block_c)

    xp = xn if Bp == B else jnp.pad(xn, ((0, Bp - B), (0, 0)))
    wp = wn if Cp == C else jnp.pad(wn, ((0, Cp - C), (0, 0)))
    lp = label.reshape(-1).astype(jnp.int32)
    if Bp != B:
        lp = jnp.pad(lp, (0, Bp - B))
    lp = lp.reshape(Bp, 1)

    # class tiles outer, batch tiles INNER -> weight tile resident across batch.
    grid = (Cp // block_c, Bp // block_b)

    kernel = functools.partial(
        _arcface_kernel,
        s=float(s),
        cos_m=math.cos(m),
        sin_m=math.sin(m),
        th=math.cos(math.pi - m),
        mm=math.sin(math.pi - m) * m,
        easy_margin=easy_margin,
    )

    # VMEM footprint incl. intermediates; cap at 56 MiB (v7x has 64 MiB / TC).
    cbytes = jnp.dtype(compute_dtype).itemsize
    obytes = jnp.dtype(out_dtype).itemsize
    tile_bytes = (2 * block_c * D * cbytes          # weight (double-buffered)
                  + 2 * block_b * D * cbytes        # streamed x
                  + 2 * block_b * 4                 # label
                  + 2 * block_b * block_c * obytes  # output
                  + 3 * block_b * block_c * 4)      # cosine / mask / f32 temps
    vmem_limit = int(min(56 * 1024 * 1024, max(32 * 1024 * 1024, 2 * tile_bytes)))

    cost = pl.CostEstimate(
        flops=2 * Bp * Cp * D,
        transcendentals=Bp * (Cp // block_c),        # one sqrt per row per class tile
        bytes_accessed=(Bp * D * cbytes + Cp * D * cbytes
                        + Bp * 4 + Bp * Cp * obytes))

    out = pl.pallas_call(
        kernel,
        out_shape=jax.ShapeDtypeStruct((Bp, Cp), out_dtype),
        grid=grid,
        in_specs=[
            pl.BlockSpec((block_b, D), lambda ci, bi: (bi, 0)),   # x: streams per batch tile
            pl.BlockSpec((block_c, D), lambda ci, bi: (ci, 0)),   # weight: resident over batch
            pl.BlockSpec((block_b, 1), lambda ci, bi: (bi, 0)),   # label: streams
        ],
        out_specs=pl.BlockSpec((block_b, block_c), lambda ci, bi: (bi, ci)),
        compiler_params=pltpu.CompilerParams(
            dimension_semantics=("parallel", "parallel"),
            vmem_limit_bytes=vmem_limit),
        cost_estimate=cost,
    )(xp, wp, lp)

    return out[:B, :C]


def _reference(x, weight, label, *, s=64.0, m=0.5, easy_margin=False):
    # Pure-JAX reference mirroring the PyTorch module (device_id=None path).
    xn = x / jnp.maximum(jnp.linalg.norm(x, axis=1, keepdims=True), 1e-12)
    wn = weight / jnp.maximum(jnp.linalg.norm(weight, axis=1, keepdims=True), 1e-12)
    cosine = xn @ wn.T
    sine = jnp.sqrt(jnp.maximum(1.0 - cosine ** 2, 0.0))
    phi = cosine * math.cos(m) - sine * math.sin(m)
    if easy_margin:
        phi = jnp.where(cosine > 0, phi, cosine)
    else:
        phi = jnp.where(cosine > math.cos(math.pi - m),
                        phi, cosine - math.sin(math.pi - m) * m)
    one_hot = jax.nn.one_hot(label, weight.shape[0], dtype=cosine.dtype)
    return (one_hot * phi + (1.0 - one_hot) * cosine) * s


if __name__ == "__main__":
    key = jax.random.PRNGKey(0)
    B, in_features, out_features = 16, 128, 512

    kx, kw, kl = jax.random.split(key, 3)
    x = jax.random.normal(kx, (B, in_features), dtype=jnp.float32)

    # Xavier (Glorot) uniform init, matching nn.init.xavier_uniform_ on a
    # (out_features, in_features) weight.  (Plain-JAX glue, not part of fwd.)
    bound = math.sqrt(6.0 / (in_features + out_features))
    weight = jax.random.uniform(kw, (out_features, in_features),
                                dtype=jnp.float32, minval=-bound, maxval=bound)
    label = jax.random.randint(kl, (B,), 0, out_features, dtype=jnp.int32)

    ref = _reference(x, weight, label, s=64.0, m=0.5, easy_margin=False)
    ref_em = _reference(x, weight, label, s=64.0, m=0.5, easy_margin=True)

    # Small tiles so the demo exercises the 2-D grid: grid = (4 class, 2 batch).
    # f32 MXU path: tight tolerance vs. reference.
    out = arcface_forward(x, weight, label, s=64.0, m=0.5, easy_margin=False,
                          block_b=8, block_c=128, compute_dtype=jnp.float32)
    out = jax.block_until_ready(out)
    assert out.shape == (B, out_features)
    assert jnp.allclose(out, ref, atol=1e-3, rtol=1e-3), "mismatch (easy_margin=False)"

    out_em = arcface_forward(x, weight, label, s=64.0, m=0.5, easy_margin=True,
                             block_b=8, block_c=128, compute_dtype=jnp.float32)
    out_em = jax.block_until_ready(out_em)
    assert jnp.allclose(out_em, ref_em, atol=1e-3, rtol=1e-3), "mismatch (easy_margin=True)"

    # Default bf16 MXU path: same semantics, looser tolerance because s=64
    # amplifies the ~1e-3 bf16 cosine rounding error into ~0.1 logit error.
    out_bf16 = arcface_forward(x, weight, label, s=64.0, m=0.5, easy_margin=False,
                               block_b=8, block_c=128)
    out_bf16 = jax.block_until_ready(out_bf16)
    assert jnp.allclose(out_bf16, ref, atol=0.5, rtol=0.02), "mismatch (bf16 path)"

    print("KERNEL_OK")
</pallas_src>

<mosaic_0001>
module attributes {stable_mosaic.version = 11 : i64} {
  func.func @_arcface_kernel(%arg0: i32, %arg1: i32, %arg2: memref<8x128xf32, #tpu.memory_space<vmem>>, %arg3: memref<128x128xf32, #tpu.memory_space<vmem>>, %arg4: memref<8x1xi32, #tpu.memory_space<vmem>>, %arg5: memref<8x128xf32, #tpu.memory_space<vmem>>) attributes {dimension_semantics = [#tpu.dimension_semantics<parallel>, #tpu.dimension_semantics<parallel>], iteration_bounds = array<i64: 4, 2>, scalar_prefetch = 0 : i64, scratch_operands = 0 : i64, tpu.core_type = #tpu.core_type<tc>, window_params = [{transform_indices = @transform_0, window_bounds = array<i64: 8, 128>}, {transform_indices = @transform_1, window_bounds = array<i64: 128, 128>}, {transform_indices = @transform_2, window_bounds = array<i64: 8, 1>}, {transform_indices = @transform_3, window_bounds = array<i64: 8, 128>}]} {
    %c0 = arith.constant 0 : index
    %c0_0 = arith.constant 0 : index
    %0 = vector.load %arg2[%c0, %c0_0] : memref<8x128xf32, #tpu.memory_space<vmem>>, vector<8x128xf32>
    %c0_1 = arith.constant 0 : index
    %c0_2 = arith.constant 0 : index
    %1 = vector.load %arg3[%c0_1, %c0_2] : memref<128x128xf32, #tpu.memory_space<vmem>>, vector<128x128xf32>
    %cst = arith.constant dense<0.000000e+00> : vector<8x128xf32>
    %2 = tpu.matmul %0, %1, %cst {dimension_numbers = #tpu.dot_dimension_numbers<[1], [1], [0], [0], [0, 0, 1, 0], [], []>} : vector<8x128xf32>, vector<128x128xf32>, vector<8x128xf32> -> vector<8x128xf32>
    %c128_i32 = arith.constant 128 : i32
    %3 = arith.muli %arg0, %c128_i32 : i32
    %4 = tpu.iota {dimensions = array<i32: 1>} : vector<8x128xi32>
    %5 = vector.broadcast %3 : i32 to vector<8x128xi32>
    %6 = arith.addi %5, %4 : vector<8x128xi32>
    %c0_3 = arith.constant 0 : index
    %c0_4 = arith.constant 0 : index
    %7 = vector.load %arg4[%c0_3, %c0_4] : memref<8x1xi32, #tpu.memory_space<vmem>>, vector<8x1xi32>
    %8 = vector.broadcast %7 : vector<8x1xi32> to vector<8x128xi32>
    %9 = arith.cmpi eq, %6, %8 : vector<8x128xi32>
    %cst_5 = arith.constant 0.000000e+00 : f32
    %10 = vector.broadcast %cst_5 : f32 to vector<8x128xf32>
    %11 = arith.select %9, %2, %10 : vector<8x128xi1>, vector<8x128xf32>
    %cst_6 = arith.constant dense<0.000000e+00> : vector<8xf32>
    %12 = vector.multi_reduction <add>, %11, %cst_6 [1] : vector<8x128xf32> to vector<8xf32>
    %13 = vector.shape_cast %12 : vector<8xf32> to vector<8x1xf32>
    %14 = arith.mulf %13, %13 : vector<8x1xf32>
    %cst_7 = arith.constant 1.000000e+00 : f32
    %15 = vector.broadcast %cst_7 : f32 to vector<8x1xf32>
    %16 = arith.subf %15, %14 : vector<8x1xf32>
    %cst_8 = arith.constant 0.000000e+00 : f32
    %17 = vector.broadcast %cst_8 : f32 to vector<8x1xf32>
    %18 = arith.maximumf %16, %17 : vector<8x1xf32>
    %19 = math.sqrt %18 : vector<8x1xf32>
    %cst_9 = arith.constant 0.87758255 : f32
    %20 = vector.broadcast %cst_9 : f32 to vector<8x1xf32>
    %21 = arith.mulf %13, %20 : vector<8x1xf32>
    %cst_10 = arith.constant 0.47942555 : f32
    %22 = vector.broadcast %cst_10 : f32 to vector<8x1xf32>
    %23 = arith.mulf %19, %22 : vector<8x1xf32>
    %24 = arith.subf %21, %23 : vector<8x1xf32>
    %cst_11 = arith.constant -0.87758255 : f32
    %25 = vector.broadcast %cst_11 : f32 to vector<8x1xf32>
    %26 = arith.cmpf ogt, %13, %25 : vector<8x1xf32>
    %cst_12 = arith.constant 0.239712775 : f32
    %27 = vector.broadcast %cst_12 : f32 to vector<8x1xf32>
    %28 = arith.subf %13, %27 : vector<8x1xf32>
    %29 = arith.select %26, %24, %28 : vector<8x1xi1>, vector<8x1xf32>
    %30 = arith.subf %29, %13 : vector<8x1xf32>
    %cst_13 = arith.constant 6.400000e+01 : f32
    %31 = vector.broadcast %cst_13 : f32 to vector<8x1xf32>
    %32 = arith.mulf %30, %31 : vector<8x1xf32>
    %cst_14 = arith.constant 6.400000e+01 : f32
    %33 = vector.broadcast %cst_14 : f32 to vector<8x128xf32>
    %34 = arith.mulf %2, %33 : vector<8x128xf32>
    %cst_15 = arith.constant 0.000000e+00 : f32
    %35 = vector.shape_cast %32 : vector<8x1xf32> to vector<8x1xf32>
    %36 = vector.broadcast %35 : vector<8x1xf32> to vector<8x128xf32>
    %37 = vector.broadcast %cst_15 : f32 to vector<8x128xf32>
    %38 = arith.select %9, %36, %37 : vector<8x128xi1>, vector<8x128xf32>
    %39 = arith.addf %34, %38 : vector<8x128xf32>
    %c0_16 = arith.constant 0 : index
    %c0_17 = arith.constant 0 : index
    %40 = vector.load %arg5[%c0_16, %c0_17] : memref<8x128xf32, #tpu.memory_space<vmem>>, vector<8x128xf32>
    tpu.vector_store %arg5[%c0_16, %c0_17], %39 {strides = array<i32>} : memref<8x128xf32, #tpu.memory_space<vmem>>, vector<8x128xf32>,
    return
  }
  func.func @transform_0(%arg0: i32, %arg1: i32) -> (i32, i32) {
    %c0_i32 = arith.constant 0 : i32
    %c0_i32_0 = arith.constant 0 : i32
    return %arg1, %c0_i32 : i32, i32
  }
  func.func @transform_1(%arg0: i32, %arg1: i32) -> (i32, i32) {
    %c0_i32 = arith.constant 0 : i32
    %c0_i32_0 = arith.constant 0 : i32
    return %arg0, %c0_i32 : i32, i32
  }
  func.func @transform_2(%arg0: i32, %arg1: i32) -> (i32, i32) {
    %c0_i32 = arith.constant 0 : i32
    %c0_i32_0 = arith.constant 0 : i32
    return %arg1, %c0_i32 : i32, i32
  }
  func.func @transform_3(%arg0: i32, %arg1: i32) -> (i32, i32) {
    %c0_i32 = arith.constant 0 : i32
    return %arg1, %arg0 : i32, i32
  }
}

</mosaic_0001>

<llo_original>
// kernel: tpu_custom_call.1
$region0: #{tpu_custom_call.1}
  #allocation0 [shape = 'u32[]', space=smem, size = 0x4, offset = 0x4, fixed_abs, tag = 'smem constant byte address 0x4 - core index']
  #allocation1 [shape = 'u32[144,128]{1,0:T(1,128)}', space=vmem, size = 0x12000, scoped, tag = 'internal scratch']
  %s0 = inlined_call_operand.vmem [shape: f32[16,128], index: 0, kind: input, shape index: {}]
  %s1 = inlined_call_operand.hbm [shape: f32[512,128], index: 1, kind: input, shape index: {}]
  %s2 = inlined_call_operand.vmem [shape: s32[16,1], index: 2, kind: input, shape index: {}]
  %s3 = inlined_call_operand.hbm [shape: f32[16,512], index: 3, kind: output, shape index: {}]
  %s4 = sld [smem:[#allocation0]]
  $region49: #{tpu_custom_call.1} parent=0
    _
  %s6 = ssub.s32 1, %s4
  %s7 = scalar_select 0, %s6, %s4
  $region1: #{tpu_custom_call.1} parent=0
    #allocation2 [shape = 'u8[131072]{0}', space=vmem, size = 0x20000, scoped, tag = 'input window, operand 1']
    #allocation3 [shape = 's32[2]{0}', space=sflag, size = 0x8, scoped, tag = 'scoped memory for tpu_custom_call.1']
    #allocation4 [shape = 's32[2]{0}', space=sflag, size = 0x8, scoped, tag = 'scoped memory for tpu_custom_call.1']
    #allocation5 [shape = 'u8[8192]{0}', space=vmem, size = 0x2000, scoped, tag = 'output window, operand 0']
    %8 = vsyncpa [#allocation3], 0
    %s9 = scalar_lea.sflag [#allocation3], 1
    %10 = vsyncpa %s9, 0
    %11 = vsyncpa [#allocation4], 0
    %s12 = scalar_lea.sflag [#allocation4], 1
    %13 = vsyncpa %s12, 0
    loop: start=0, step=1, limit=10
    $region2: #{tpu_custom_call.1} parent=1 // loop_pre_header
      _
    $region3: #{tpu_custom_call.1} parent=1 // loop_header
      %s15 = sphi 0, %s19
      %p16 = scmp.ge.s32.totalorder %s15, 10
      %s22 = sphi 0, %s34
      %s23 = sphi 0, %s30
      %s24 = sphi 0, %s22
      %s25 = sphi 0, %s23
      %s26 = sphi 0, %s24
      %s27 = sphi 0, %s25
      %s37 = sphi 0, %s39
      %s40 = sphi 0, %s37
      %s41 = sphi 0, %s40
      %s57 = sphi 0, %s41
      %s63 = sphi 0, %s65
      %s66 = sphi 0, %s63
      %s67 = sphi 0, %s66
      %s83 = sphi 0, %s67
      %s89 = sphi 0, %s91
      %s92 = sphi 0, %s89
      %s93 = sphi 0, %s92
      %s109 = sphi 0, %s93
      %s117 = sphi 0, %s119
      %s120 = sphi 0, %s117
      %s121 = sphi 0, %s120
      %s137 = sphi 0, %s121
    $region4: #{tpu_custom_call.1} parent=1 // loop_header_branch
      %18 = sbr.rel (%p16) target = $region8
    $region5: #{tpu_custom_call.1} parent=1 // loop_body
      %s20 = ssub.s32 %s15, 1
      %s21 = ssub.s32 %s15, 2
      %s28 = sadd.s32 1, %s23
      %p29 = scmp.ge.s32.totalorder %s28, 2
      %s30 = scalar_select %p29, 0, %s28
      %s31 = sadd.s32 1, %s22
      %s32 = scalar_select %p29, %s31, %s22
      %p33 = scmp.ge.s32.totalorder %s32, 4
      %s34 = scalar_select %p33, 0, %s32
      %s35 = ssub.s32 %s23, %s30
      %p36 = scmp.eq.s32.totalorder %s35, 0
      %s38 = sadd.s32 %s37, 1
      %s39 = scalar_select %p36, %s37, %s38
      %p42 = pneg %p36
      %p43 = scmp.eq.s32.totalorder %s15, 7
      %p44 = por %p42, %p43
      %p45 = scmp.ne.s32.totalorder %s37, %s40
      %p46 = scmp.eq.s32.totalorder %s15, 0
      %p47 = por %p45, %p46
      %p48 = scmp.ne.s32.totalorder %s37, %s40
      %p49 = scmp.eq.s32.totalorder %s20, 7
      %p50 = por %p48, %p49
      %p51 = scmp.ne.s32.totalorder %s40, %s41
      %p52 = scmp.eq.s32.totalorder %s20, 0
      %p53 = por %p51, %p52
      %p54 = scmp.ne.s32.totalorder %s40, %s41
      %p55 = scmp.eq.s32.totalorder %s21, 7
      %p56 = por %p54, %p55
      %p58 = scmp.ne.s32.totalorder %s41, %s57
      %p59 = scmp.eq.s32.totalorder %s21, 0
      %p60 = por %p58, %p59
      %s61 = ssub.s32 %s22, %s34
      %p62 = scmp.eq.s32.totalorder %s61, 0
      %s64 = sadd.s32 %s63, 1
      %s65 = scalar_select %p62, %s63, %s64
      %p68 = pneg %p62
      %p69 = scmp.eq.s32.totalorder %s15, 7
      %p70 = por %p68, %p69
      %p71 = scmp.ne.s32.totalorder %s63, %s66
      %p72 = scmp.eq.s32.totalorder %s15, 0
      %p73 = por %p71, %p72
      %p74 = scmp.ne.s32.totalorder %s63, %s66
      %p75 = scmp.eq.s32.totalorder %s20, 7
      %p76 = por %p74, %p75
      %p77 = scmp.ne.s32.totalorder %s66, %s67
      %p78 = scmp.eq.s32.totalorder %s20, 0
      %p79 = por %p77, %p78
      %p80 = scmp.ne.s32.totalorder %s66, %s67
      %p81 = scmp.eq.s32.totalorder %s21, 7
      %p82 = por %p80, %p81
      %p84 = scmp.ne.s32.totalorder %s67, %s83
      %p85 = scmp.eq.s32.totalorder %s21, 0
      %p86 = por %p84, %p85
      %s87 = ssub.s32 %s23, %s30
      %p88 = scmp.eq.s32.totalorder %s87, 0
      %s90 = sadd.s32 %s89, 1
      %s91 = scalar_select %p88, %s89, %s90
      %p94 = pneg %p88
      %p95 = scmp.eq.s32.totalorder %s15, 7
      %p96 = por %p94, %p95
      %p97 = scmp.ne.s32.totalorder %s89, %s92
      %p98 = scmp.eq.s32.totalorder %s15, 0
      %p99 = por %p97, %p98
      %p100 = scmp.ne.s32.totalorder %s89, %s92
      %p101 = scmp.eq.s32.totalorder %s20, 7
      %p102 = por %p100, %p101
      %p103 = scmp.ne.s32.totalorder %s92, %s93
      %p104 = scmp.eq.s32.totalorder %s20, 0
      %p105 = por %p103, %p104
      %p106 = scmp.ne.s32.totalorder %s92, %s93
      %p107 = scmp.eq.s32.totalorder %s21, 7
      %p108 = por %p106, %p107
      %p110 = scmp.ne.s32.totalorder %s93, %s109
      %p111 = scmp.eq.s32.totalorder %s21, 0
      %p112 = por %p110, %p111
      %s113 = ssub.s32 %s23, %s30
      %s114 = ssub.s32 %s22, %s34
      %s115 = sor.u32 %s113, %s114
      %p116 = scmp.eq.s32.totalorder %s115, 0
      %s118 = sadd.s32 %s117, 1
      %s119 = scalar_select %p116, %s117, %s118
      %p122 = pneg %p116
      %p123 = scmp.eq.s32.totalorder %s15, 7
      %p124 = por %p122, %p123
      %p125 = scmp.ne.s32.totalorder %s117, %s120
      %p126 = scmp.eq.s32.totalorder %s15, 0
      %p127 = por %p125, %p126
      %p128 = scmp.ne.s32.totalorder %s117, %s120
      %p129 = scmp.eq.s32.totalorder %s20, 7
      %p130 = por %p128, %p129
      %p131 = scmp.ne.s32.totalorder %s120, %s121
      %p132 = scmp.eq.s32.totalorder %s20, 0
      %p133 = por %p131, %p132
      %p134 = scmp.ne.s32.totalorder %s120, %s121
      %p135 = scmp.eq.s32.totalorder %s21, 7
      %p136 = por %p134, %p135
      %p138 = scmp.ne.s32.totalorder %s121, %s137
      %p139 = scmp.eq.s32.totalorder %s21, 0
      %p140 = por %p138, %p139
      %p141 = scmp.le.s32.totalorder 1, %s15
      %p142 = scmp.lt.s32.totalorder %s15, 9
      %p143 = pnand %p141, %p142
      %p144 = pneg %p143
      // Predicated region
      $region9: #{tpu_custom_call.1} parent=5 // pred_check
        _
      $region10: #{tpu_custom_call.1} parent=5 // pred_check_branch
        %146 = sbr.rel (%p143) target = $region12
      $region11: #{tpu_custom_call.1} parent=5 // pred_region
        %s147 = ssub.s32 %s15, 1
      $region12: #{tpu_custom_call.1} parent=5 // pred_fallthru
        _
      %p148 = scmp.lt.s32.totalorder %s15, 8
      // Predicated region
      $region13: #{tpu_custom_call.1} parent=5 // pred_check
        %p149 = pneg %p148
      $region14: #{tpu_custom_call.1} parent=5 // pred_check_branch
        %151 = sbr.rel (%p149) target = $region16
      $region15: #{tpu_custom_call.1} parent=5 // pred_region
        // Predicated region
        $region17: #{tpu_custom_call.1} parent=15 // pred_check
          %p152 = pneg %p47
        $region18: #{tpu_custom_call.1} parent=15 // pred_check_branch
          %154 = sbr.rel (%p152) target = $region20
        $region19: #{tpu_custom_call.1} parent=15 // pred_region
          %p155 = scmp.lt.s32.totalorder %s23, 1
          %s156 = scalar_select %p155, %s23, 1
          %s157 = smul.addr %s156, 8
          %s158 = scalar_lea.vmem %s0, %s157
        $region20: #{tpu_custom_call.1} parent=15 // pred_fallthru
          _
        // Predicated region
        $region21: #{tpu_custom_call.1} parent=15 // pred_check
          %p159 = pneg %p73
        $region22: #{tpu_custom_call.1} parent=15 // pred_check_branch
          %161 = sbr.rel (%p159) target = $region24
        $region23: #{tpu_custom_call.1} parent=15 // pred_region
          %s162 = sand.u32 %s63, 1
          %s163 = scalar_lea.sflag [#allocation3], %s162
          %s164 = sand.u32 %s63, 1
          %s165 = smul.addr %s164, 128
          %s166 = scalar_lea.vmem [#allocation2], %s165
          %s167 = smul.u32 16, %s22
          %s169 = ssub.s32 2048, 2048
          %170 = vsyncadd %s163, %s169
          %s171 = smul.addr %s167, 128
          %s172 = scalar_lea.hbm %s1, %s171
          %s173 = sshll.u32 %s166, 4
          %s174 = int_to_ptr.vmem [resolvable:$true] %s173
          %179 = dma.hbm_to_vmem [thread:$0]  %s172, 2048, %s174, %s163, 128, 128, 8
        $region24: #{tpu_custom_call.1} parent=15 // pred_fallthru
          _
        // Predicated region
        $region25: #{tpu_custom_call.1} parent=15 // pred_check
          %p180 = pneg %p99
        $region26: #{tpu_custom_call.1} parent=15 // pred_check_branch
          %182 = sbr.rel (%p180) target = $region28
        $region27: #{tpu_custom_call.1} parent=15 // pred_region
          %p183 = scmp.lt.s32.totalorder %s23, 1
          %s184 = scalar_select %p183, %s23, 1
          %s185 = smul.addr %s184, 8
          %s186 = scalar_lea.vmem %s2, %s185
        $region28: #{tpu_custom_call.1} parent=15 // pred_fallthru
          _
      $region16: #{tpu_custom_call.1} parent=5 // pred_fallthru
        _
      %p187 = scmp.le.s32.totalorder 1, %s15
      %p188 = scmp.lt.s32.totalorder %s15, 9
      %p189 = pnand %p187, %p188
      %p190 = pneg %p189
      // Predicated region
      $region29: #{tpu_custom_call.1} parent=5 // pred_check
        _
      $region30: #{tpu_custom_call.1} parent=5 // pred_check_branch
        %192 = sbr.rel (%p189) target = $region32
      $region31: #{tpu_custom_call.1} parent=5 // pred_region
        %s193 = ssub.s32 %s15, 1
        %s194 = sand.u32 %s66, 1
        %s195 = scalar_lea.sflag [#allocation3], %s194
        %s196 = sand.u32 %s66, 1
        %s197 = smul.addr %s196, 128
        %s198 = scalar_lea.vmem [#allocation2], %s197
        // Predicated region
        $region33: #{tpu_custom_call.1} parent=31 // pred_check
          %p199 = pneg %p79
        $region34: #{tpu_custom_call.1} parent=31 // pred_check_branch
          %201 = sbr.rel (%p199) target = $region36
        $region35: #{tpu_custom_call.1} parent=31 // pred_region
          %202 = dma.done %s195, 2048
        $region36: #{tpu_custom_call.1} parent=31 // pred_fallthru
          _
        %p203 = scmp.lt.s32.totalorder %s25, 1
        %s204 = scalar_select %p203, %s25, 1
        %s205 = smul.addr %s204, 8
        %s206 = scalar_lea.vmem %s0, %s205
        %p207 = pneg %p53
        %p208 = pneg %p50
        %s209 = sand.u32 %s66, 1
        %s210 = scalar_lea.sflag [#allocation3], %s209
        %s211 = sand.u32 %s66, 1
        %s212 = smul.addr %s211, 128
        %s213 = scalar_lea.vmem [#allocation2], %s212
        %p214 = pneg %p79
        %p215 = pneg %p76
        %p216 = scmp.lt.s32.totalorder %s25, 1
        %s217 = scalar_select %p216, %s25, 1
        %s218 = smul.addr %s217, 8
        %s219 = scalar_lea.vmem %s2, %s218
        %p220 = pneg %p105
        %p221 = pneg %p102
        %p222 = pneg %p133
        %p223 = pneg %p130
        %s224 = sand.u32 %s120, 1
        %s225 = scalar_lea.sflag [#allocation4], %s224
        %s226 = sand.u32 %s120, 1
        %s227 = smul.addr %s226, 8
        %s228 = scalar_lea.vmem [#allocation5], %s227
        %p229 = scmp.lt.s32.totalorder %s25, 1
        %s230 = scalar_select %p229, %s25, 1
        %s231 = smul.addr %s230, 8
        %s232 = scalar_lea.vmem %s0, %s231
        %s233 = smul.u32 16, %s24
        %p234 = scmp.lt.s32.totalorder %s25, 1
        %s235 = scalar_select %p234, %s25, 1
        %s236 = smul.addr %s235, 8
        %s237 = scalar_lea.vmem %s2, %s236
        %v238 = vld [vmem:[%s232] sm:$0xff]
        %v239 = vld [vmem:[%s198] sm:$0xff]
        %v240 = vld [vmem:[%s198 + $0x8] sm:$0xff]
        %v241 = vld [vmem:[%s198 + $0x10] sm:$0xff]
        %v242 = vld [vmem:[%s198 + $0x18] sm:$0xff]
        %v243 = vld [vmem:[%s198 + $0x20] sm:$0xff]
        %v244 = vld [vmem:[%s198 + $0x28] sm:$0xff]
        %v245 = vld [vmem:[%s198 + $0x30] sm:$0xff]
        %v246 = vld [vmem:[%s198 + $0x38] sm:$0xff]
        %v247 = vld [vmem:[%s198 + $0x40] sm:$0xff]
        %v248 = vld [vmem:[%s198 + $0x48] sm:$0xff]
        %v249 = vld [vmem:[%s198 + $0x50] sm:$0xff]
        %v250 = vld [vmem:[%s198 + $0x58] sm:$0xff]
        %v251 = vld [vmem:[%s198 + $0x60] sm:$0xff]
        %v252 = vld [vmem:[%s198 + $0x68] sm:$0xff]
        %v253 = vld [vmem:[%s198 + $0x70] sm:$0xff]
        %v254 = vld [vmem:[%s198 + $0x78] sm:$0xff]
        %255 = vmatprep.subr.mxu0 0.0
        %256 = vmatpush1.xpose.msra.mxu0 %v239
        %257 = vmatprep.subr.mxu0 0.0
        %258 = vmatpush1.xpose.msra.mxu0 %v240
        %259 = vmatprep.subr.mxu0 0.0
        %260 = vmatpush1.xpose.msra.mxu0 %v241
        %261 = vmatprep.subr.mxu0 0.0
        %262 = vmatpush1.xpose.msra.mxu0 %v242
        %263 = vmatprep.subr.mxu0 0.0
        %264 = vmatpush1.xpose.msra.mxu0 %v243
        %265 = vmatprep.subr.mxu0 0.0
        %266 = vmatpush1.xpose.msra.mxu0 %v244
        %267 = vmatprep.subr.mxu0 0.0
        %268 = vmatpush1.xpose.msra.mxu0 %v245
        %269 = vmatprep.subr.mxu0 0.0
        %270 = vmatpush1.xpose.msra.mxu0 %v246
        %271 = vmatprep.subr.mxu0 0.0
        %272 = vmatpush1.xpose.msra.mxu0 %v247
        %273 = vmatprep.subr.mxu0 0.0
        %274 = vmatpush1.xpose.msra.mxu0 %v248
        %275 = vmatprep.subr.mxu0 0.0
        %276 = vmatpush1.xpose.msra.mxu0 %v249
        %277 = vmatprep.subr.mxu0 0.0
        %278 = vmatpush1.xpose.msra.mxu0 %v250
        %279 = vmatprep.subr.mxu0 0.0
        %280 = vmatpush1.xpose.msra.mxu0 %v251
        %281 = vmatprep.subr.mxu0 0.0
        %282 = vmatpush1.xpose.msra.mxu0 %v252
        %283 = vmatprep.subr.mxu0 0.0
        %284 = vmatpush1.xpose.msra.mxu0 %v253
        %285 = vmatprep.subr.mxu0 0.0
        %286 = vmatpush1.xpose.msra.mxu0 %v254
        %287 = vmatprep.subr.mxu0 0.0
        %288 = vmatpush1.xpose.msra.mxu0 0.0
        %289 = vmatprep.subr.mxu0 0.0
        %290 = vmatpush1.xpose.msra.mxu0 0.0
        %291 = vmatprep.subr.mxu0 0.0
        %292 = vmatpush1.xpose.msra.mxu0 0.0
        %293 = vmatprep.subr.mxu0 0.0
        %294 = vmatpush1.xpose.msra.mxu0 0.0
        %295 = vmatprep.subr.mxu0 0.0
        %296 = vmatpush1.xpose.msra.mxu0 0.0
        %297 = vmatprep.subr.mxu0 0.0
        %298 = vmatpush1.xpose.msra.mxu0 0.0
        %299 = vmatprep.subr.mxu0 0.0
        %300 = vmatpush1.xpose.msra.mxu0 0.0
        %301 = vmatprep.subr.mxu0 0.0
        %302 = vmatpush1.xpose.msra.mxu0 0.0
        %303 = vmatprep.subr.mxu0 0.0
        %304 = vmatpush1.xpose.msra.mxu0 0.0
        %305 = vmatprep.subr.mxu0 0.0
        %306 = vmatpush1.xpose.msra.mxu0 0.0
        %307 = vmatprep.subr.mxu0 0.0
        %308 = vmatpush1.xpose.msra.mxu0 0.0
        %309 = vmatprep.subr.mxu0 0.0
        %310 = vmatpush1.xpose.msra.mxu0 0.0
        %311 = vmatprep.subr.mxu0 0.0
        %312 = vmatpush1.xpose.msra.mxu0 0.0
        %313 = vmatprep.subr.mxu0 0.0
        %314 = vmatpush1.xpose.msra.mxu0 0.0
        %315 = vmatprep.subr.mxu0 0.0
        %316 = vmatpush1.xpose.msra.mxu0 0.0
        %317 = vmatprep.subr.mxu0 0.0
        %318 = vmatpush1.xpose.msra.mxu0 0.0
        %319 = vmatprep.mubr.f32.mxu0 0.0
        %320 = vmatmul.mubr.f32.gmra.mrb[0].mxu0 %v238
        %v321 = vpop.f32.mrb[0].mxu0
        %v322 = vadd.f32 0.0, %v321
        %v323 = vpop.f32.mrb[0].mxu0
        %324 = vdwg.mxu0
        %s325 = smul.u32 %s24, 128
        %v326 = vlaneseq
        %v327 = vand.u32 %v326, 127
        %v328 = vstv %s325
        %v329 = vadd.s32 %v328, %v327
        %v330 = vld [vmem:[%s237] sm:$0xff]
        %331 = vset.pattern.permute.xlu0 0
        %332 = vperm.xlu0 %331, %v330
        %v333 = vpop.permute.xlu0 %332
        %vm334 = vcmp.eq.s32.totalorder %v329, %v333
        %v335 = vsel %vm334, %v322, 0.0
        %336 = vadd.xlane.f32.xlu0 %v335
        %v337 = vpop.xlane.xlu0 %336
        %v338 = vmul.f32 %v337, %v337
        %v339 = vsub.f32 1.0, %v338
        %v340 = vmax.f32 %v339, 0.0
        %v341 = vrsqrt.pop %v340
        %v342 = vmul.f32 %v340, %v341
        %vm343 = vcmp.eq.f32.partialorder %v340, inf
        %v344 = vsel %vm343, %v340, %v342
        %vm345 = vcmp.eq.f32.partialorder %v340, 0.0
        %v346 = vand.u32 %v340, 2147483648
        %v347 = vsel %vm345, %v346, %v344
        %v348 = vmul.f32 %v337, 0.87758255
        %v349 = vmul.f32 %v347, 0.47942555
        %v350 = vsub.f32 %v348, %v349
        %vm351 = vcmp.gt.f32.partialorder %v337, -0.87758255
        %v352 = vsub.f32 %v337, 0.23971277
        %v353 = vsel %vm351, %v350, %v352
        %v354 = vsub.f32 %v353, %v337
        %v355 = vmul.f32 %v354, 64.0
        %v356 = vmul.f32 %v322, 64.0
        %v357 = vsel %vm334, %v355, 0.0
        %v358 = vadd.f32 %v356, %v357
        %359 = vst [vmem:[%s228] sm:$0xff] %v358
        %s360 = sand.u32 %s120, 1
        %s361 = scalar_lea.sflag [#allocation4], %s360
        %s362 = sand.u32 %s120, 1
        %s363 = smul.addr %s362, 8
        %s364 = scalar_lea.vmem [#allocation5], %s363
        // Predicated region
        $region37: #{tpu_custom_call.1} parent=31 // pred_check
          %p365 = pneg %p130
        $region38: #{tpu_custom_call.1} parent=31 // pred_check_branch
          %367 = sbr.rel (%p365) target = $region40
        $region39: #{tpu_custom_call.1} parent=31 // pred_region
          %s369 = ssub.s32 128, 128
          %370 = vsyncadd %s361, %s369
          %s371 = smul.addr %s25, 4
          %s372 = sadd.s32 %s24, %s371
          %s373 = smul.addr %s372, 128
          %s374 = scalar_lea.hbm %s3, %s373
          %s376 = sshll.u32 %s364, 4
          %s377 = int_to_ptr.vmem [resolvable:$true] %s376
          %379 = dma.vmem_to_hbm [thread:$0]  %s377, 128, %s374, %s361
        $region40: #{tpu_custom_call.1} parent=31 // pred_fallthru
          _
      $region32: #{tpu_custom_call.1} parent=5 // pred_fallthru
        _
      %p380 = scmp.le.s32.totalorder 2, %s15
      // Predicated region
      $region41: #{tpu_custom_call.1} parent=5 // pred_check
        %p381 = pneg %p380
      $region42: #{tpu_custom_call.1} parent=5 // pred_check_branch
        %383 = sbr.rel (%p381) target = $region44
      $region43: #{tpu_custom_call.1} parent=5 // pred_region
        %s384 = ssub.s32 %s15, 2
        // Predicated region
        $region45: #{tpu_custom_call.1} parent=43 // pred_check
          %p385 = pneg %p136
        $region46: #{tpu_custom_call.1} parent=43 // pred_check_branch
          %387 = sbr.rel (%p385) target = $region48
        $region47: #{tpu_custom_call.1} parent=43 // pred_region
          %s388 = sand.u32 %s121, 1
          %s389 = scalar_lea.sflag [#allocation4], %s388
          %s390 = sand.u32 %s121, 1
          %s391 = smul.addr %s390, 8
          %s392 = scalar_lea.vmem [#allocation5], %s391
          %393 = dma.done %s389, 128
        $region48: #{tpu_custom_call.1} parent=43 // pred_fallthru
          _
      $region44: #{tpu_custom_call.1} parent=5 // pred_fallthru
        _
    $region6: #{tpu_custom_call.1} parent=1 // loop_footer
      %s19 = sadd.s32 1, %s15
    $region7: #{tpu_custom_call.1} parent=1 // loop_footer_branch
      %14 = sbr.rel target = $region3
    $region8: #{tpu_custom_call.1} parent=1 // loop_exit
      _
    %394 = vsyncpa [#allocation3], 1
    %s395 = scalar_lea.sflag [#allocation3], 1
    %396 = vsyncpa %s395, 1
    %397 = vsyncpa [#allocation4], 1
    %s398 = scalar_lea.sflag [#allocation4], 1
    %399 = vsyncpa %s398, 1

</llo_original>
